<compile_context>
chip_gen: v5e
topology: v5e:2x2
jax: 0.10.0
libtpu: 0.0.40
codegen_flags: <defaults>
</compile_context>

<pallas_src>
import functools

import jax
import jax.numpy as jnp
from jax.experimental import pallas as pl
from jax.experimental.pallas import tpu as pltpu

NUM_LAYERS = 4  # the module always concatenates the last four hidden states


def _round_up(x: int, m: int) -> int:
    return ((x + m - 1) // m) * m


def _pick_batch_tile(b: int, block_b: int) -> int:
    """Batch tile: full-dim block for tiny batches (always legal), otherwise a
    multiple of 16 with at least 2 tiles so v7x's two TensorCores both work."""
    if b <= 32:
        return b
    block_b = max(16, _round_up(block_b, 16))
    half = _round_up(-(-b // 2), 16)  # ceil(b/2) rounded up to 16
    return min(block_b, half)


def _concat_regression_kernel(x0_ref, x1_ref, x2_ref, x3_ref, w_ref, b_ref, o_ref):
    """One batch tile of logits = [x0|x1|x2|x3] @ W_prepared + bias.

    x*_ref : (tb, H)        CLS activations of hidden_states[-4..-1] (f32 in HBM)
    w_ref  : (4, H, C_pad)  bf16 prepared fc weight (resident across tiles)
    b_ref  : (1, C_pad)     f32 prepared fc bias    (resident across tiles)
    o_ref  : (tb, C_pad)    f32 logits (lane-dense, class dim padded to 128)
    """
    acc = jnp.dot(x0_ref[...].astype(jnp.bfloat16), w_ref[0],
                  preferred_element_type=jnp.float32)
    acc += jnp.dot(x1_ref[...].astype(jnp.bfloat16), w_ref[1],
                   preferred_element_type=jnp.float32)
    acc += jnp.dot(x2_ref[...].astype(jnp.bfloat16), w_ref[2],
                   preferred_element_type=jnp.float32)
    acc += jnp.dot(x3_ref[...].astype(jnp.bfloat16), w_ref[3],
                   preferred_element_type=jnp.float32)
    o_ref[...] = acc + b_ref[...]


def prepare_fc_params(fc_weight, fc_bias, hidden_size, compute_dtype=jnp.bfloat16):
    """One-time re-layout of nn.Linear(hidden_size*4, C) params.

    fc_weight: (C, 4H) PyTorch layout; fc_bias: (C,).
    Returns (w_prepared (4, H, C_pad) compute_dtype, b_prepared (1, C_pad) f32),
    where w_prepared[l] = fc_weight[:, l*H:(l+1)*H].T  (torch.cat order:
    hidden_states[-4], [-3], [-2], [-1]).  Call once and cache.
    """
    c, k = fc_weight.shape
    assert k == NUM_LAYERS * hidden_size
    c_pad = max(_round_up(c, 128), 128)
    w_t = fc_weight.T.astype(compute_dtype).reshape(NUM_LAYERS, hidden_size, c)
    w_prepared = jnp.zeros((NUM_LAYERS, hidden_size, c_pad), compute_dtype)
    w_prepared = w_prepared.at[:, :, :c].set(w_t)
    b_prepared = jnp.zeros((1, c_pad), jnp.float32)
    b_prepared = b_prepared.at[0, :c].set(fc_bias.astype(jnp.float32))
    return w_prepared, b_prepared


@functools.partial(jax.jit, static_argnames=("num_classes", "block_b"))
def concat_regression_forward(hs_m4, hs_m3, hs_m2, hs_m1, w_prepared, b_prepared,
                              *, num_classes, block_b=512):
    """hs_m4..hs_m1: hidden_states[-4], [-3], [-2], [-1], each (B, S, H).
    Returns logits (B, num_classes), matching
        fc(dropout(cat(hidden_states[-4:], dim=2)[:, 0, :]))  in eval mode.
    """
    b, s, h = hs_m4.shape
    l, h_w, c_pad = w_prepared.shape
    assert l == NUM_LAYERS and h_w == h
    assert h % 128 == 0 or s == 1, (
        "fused CLS gather needs hidden_size % 128 == 0 (true for transformer "
        "hidden sizes) or seq_len == 1")
    # Dropout(p=0.2) is identity in eval/inference mode.
    # TODO(synk): training-mode dropout (pltpu.prng_random_bits mask) not emitted.

    # Free contiguous reshape (no HBM copy): (B, S, H) -> (B, S*H).  The
    # BlockSpec's last-dim block of size H at block index 0 then reads exactly
    # the CLS token's features -- no slice/transpose/cast/pad round trips.
    xs = [a.reshape(b, s * h) for a in (hs_m4, hs_m3, hs_m2, hs_m1)]

    tb = _pick_batch_tile(b, block_b)
    grid = (pl.cdiv(b, tb),)

    # VMEM footprint: 4 double-buffered activation tiles + resident weight/bias
    # (also double-buffered by the pipeline) + double-buffered output tile.
    act_bytes = xs[0].dtype.itemsize
    vmem_bytes = (2 * NUM_LAYERS * tb * h * act_bytes
                  + 2 * (NUM_LAYERS * h * c_pad * w_prepared.dtype.itemsize
                         + c_pad * 4)
                  + 2 * tb * c_pad * 4)
    vmem_limit = min(128 * 1024 * 1024, _round_up(vmem_bytes, 1 << 20) + (4 << 20))

    out = pl.pallas_call(
        _concat_regression_kernel,
        out_shape=jax.ShapeDtypeStruct((b, c_pad), jnp.float32),
        grid_spec=pltpu.PrefetchScalarGridSpec(
            num_scalar_prefetch=0,
            grid=grid,
            in_specs=(
                [pl.BlockSpec((tb, h), lambda i: (i, 0))      # CLS rows, tiled on B
                 for _ in range(NUM_LAYERS)]
                + [pl.BlockSpec((NUM_LAYERS, h, c_pad), lambda i: (0, 0, 0)),  # weight
                   pl.BlockSpec((1, c_pad), lambda i: (0, 0))]                  # bias
            ),
            out_specs=pl.BlockSpec((tb, c_pad), lambda i: (i, 0)),
        ),
        compiler_params=pltpu.CompilerParams(
            dimension_semantics=("parallel",),
            vmem_limit_bytes=vmem_limit,
        ),
    )(*xs, w_prepared, b_prepared)

    return out[:, :num_classes]


def _reference_f32(hidden_states, fc_weight, fc_bias):
    """Pure-JAX f32 reference mirroring the PyTorch forward (eval mode)."""
    cat = jnp.concatenate(list(hidden_states), axis=-1)      # (B, S, 4H)
    cls = cat[:, 0, :]                                       # (B, 4H)
    return cls @ fc_weight.T + fc_bias                       # (B, C)


def _reference_bf16_inputs(hidden_states, fc_weight, fc_bias):
    """Reference with the same bf16-input / f32-accumulate math as the kernel."""
    cat = jnp.concatenate(list(hidden_states), axis=-1)
    cls = cat[:, 0, :].astype(jnp.bfloat16).astype(jnp.float32)
    w = fc_weight.astype(jnp.bfloat16).astype(jnp.float32)
    return cls @ w.T + fc_bias


if __name__ == "__main__":
    key = jax.random.PRNGKey(0)

    # Small, module-consistent shapes (hidden_size multiple of 128, as for any
    # real transformer backbone).
    B = 2            # batch
    S = 8            # sequence length (<= max_length)
    H = 128          # hidden_size
    C = 3            # num_classes

    k_hs, k_w, k_b = jax.random.split(key, 3)

    # Synthetic "last 4 hidden states" of the backbone.
    # TODO(synk): tokenizer + transformer backbone are external and not reproduced here.
    hidden_states = jax.random.normal(k_hs, (NUM_LAYERS, B, S, H), dtype=jnp.float32)
    hs_m4, hs_m3, hs_m2, hs_m1 = (hidden_states[i] for i in range(NUM_LAYERS))

    # Deterministic nn.Linear(hidden_size*4, num_classes) init:
    # uniform(-1/sqrt(fan_in), 1/sqrt(fan_in)).
    fan_in = NUM_LAYERS * H
    bound = 1.0 / (fan_in ** 0.5)
    fc_weight = jax.random.uniform(
        k_w, (C, fan_in), dtype=jnp.float32, minval=-bound, maxval=bound)
    fc_bias = jax.random.uniform(
        k_b, (C,), dtype=jnp.float32, minval=-bound, maxval=bound)

    # One-time weight/bias re-layout (cache across forward calls).
    w_prepared, b_prepared = prepare_fc_params(fc_weight, fc_bias, hidden_size=H)

    out = concat_regression_forward(
        hs_m4, hs_m3, hs_m2, hs_m1, w_prepared, b_prepared, num_classes=C)
    out = jax.block_until_ready(out)
    assert out.shape == (B, C), out.shape

    # Tight check against a reference using the same bf16-input / f32-accumulate math.
    ref_bf16 = _reference_bf16_inputs([hs_m4, hs_m3, hs_m2, hs_m1], fc_weight, fc_bias)
    assert jnp.allclose(out, ref_bf16, atol=2e-3, rtol=2e-3), (
        "Pallas output mismatch vs bf16-input reference")

    # Looser sanity check against the full-f32 PyTorch-equivalent reference.
    # (bf16 activations/weights on the MXU -> not bitwise-identical to f32 math.)
    ref_f32 = _reference_f32([hs_m4, hs_m3, hs_m2, hs_m1], fc_weight, fc_bias)
    assert jnp.allclose(out, ref_f32, atol=5e-2, rtol=5e-2), (
        "Pallas output diverges from f32 reference beyond bf16 tolerance")

    print("KERNEL_OK")
</pallas_src>

<mosaic_0001>
module attributes {stable_mosaic.version = 11 : i64} {
  func.func @_concat_regression_kernel(%arg0: i32, %arg1: memref<2x128xf32, #tpu.memory_space<vmem>>, %arg2: memref<2x128xf32, #tpu.memory_space<vmem>>, %arg3: memref<2x128xf32, #tpu.memory_space<vmem>>, %arg4: memref<2x128xf32, #tpu.memory_space<vmem>>, %arg5: memref<4x128x128xbf16, #tpu.memory_space<vmem>>, %arg6: memref<1x128xf32, #tpu.memory_space<vmem>>, %arg7: memref<2x128xf32, #tpu.memory_space<vmem>>) attributes {dimension_semantics = [#tpu.dimension_semantics<parallel>], iteration_bounds = array<i64: 1>, scalar_prefetch = 0 : i64, scratch_operands = 0 : i64, tpu.core_type = #tpu.core_type<tc>, window_params = [{transform_indices = @transform_0, window_bounds = array<i64: 2, 128>}, {transform_indices = @transform_1, window_bounds = array<i64: 2, 128>}, {transform_indices = @transform_2, window_bounds = array<i64: 2, 128>}, {transform_indices = @transform_3, window_bounds = array<i64: 2, 128>}, {pipeline_mode = #tpu.pipeline_mode<synchronous>, transform_indices = @transform_4, window_bounds = array<i64: 4, 128, 128>}, {pipeline_mode = #tpu.pipeline_mode<synchronous>, transform_indices = @transform_5, window_bounds = array<i64: 1, 128>}, {transform_indices = @transform_6, window_bounds = array<i64: 2, 128>}]} {
    %c0 = arith.constant 0 : index
    %c0_0 = arith.constant 0 : index
    %0 = vector.load %arg1[%c0, %c0_0] : memref<2x128xf32, #tpu.memory_space<vmem>>, vector<2x128xf32>
    %1 = arith.truncf %0 : vector<2x128xf32> to vector<2x128xbf16>
    %c0_1 = arith.constant 0 : index
    %c0_2 = arith.constant 0 : index
    %c0_3 = arith.constant 0 : index
    %2 = vector.load %arg5[%c0_1, %c0_2, %c0_3] : memref<4x128x128xbf16, #tpu.memory_space<vmem>>, vector<1x128x128xbf16>
    %3 = vector.shape_cast %2 : vector<1x128x128xbf16> to vector<128x128xbf16>
    %cst = arith.constant dense<0.000000e+00> : vector<2x128xf32>
    %4 = tpu.matmul %1, %3, %cst {dimension_numbers = #tpu.dot_dimension_numbers<[1], [0], [0], [1], [0, 0, 1, 1], [], []>} : vector<2x128xbf16>, vector<128x128xbf16>, vector<2x128xf32> -> vector<2x128xf32>
    %c0_4 = arith.constant 0 : index
    %c0_5 = arith.constant 0 : index
    %5 = vector.load %arg2[%c0_4, %c0_5] : memref<2x128xf32, #tpu.memory_space<vmem>>, vector<2x128xf32>
    %6 = arith.truncf %5 : vector<2x128xf32> to vector<2x128xbf16>
    %c1 = arith.constant 1 : index
    %c0_6 = arith.constant 0 : index
    %c0_7 = arith.constant 0 : index
    %7 = vector.load %arg5[%c1, %c0_6, %c0_7] : memref<4x128x128xbf16, #tpu.memory_space<vmem>>, vector<1x128x128xbf16>
    %8 = vector.shape_cast %7 : vector<1x128x128xbf16> to vector<128x128xbf16>
    %cst_8 = arith.constant dense<0.000000e+00> : vector<2x128xf32>
    %9 = tpu.matmul %6, %8, %cst_8 {dimension_numbers = #tpu.dot_dimension_numbers<[1], [0], [0], [1], [0, 0, 1, 1], [], []>} : vector<2x128xbf16>, vector<128x128xbf16>, vector<2x128xf32> -> vector<2x128xf32>
    %10 = arith.addf %4, %9 : vector<2x128xf32>
    %c0_9 = arith.constant 0 : index
    %c0_10 = arith.constant 0 : index
    %11 = vector.load %arg3[%c0_9, %c0_10] : memref<2x128xf32, #tpu.memory_space<vmem>>, vector<2x128xf32>
    %12 = arith.truncf %11 : vector<2x128xf32> to vector<2x128xbf16>
    %c2 = arith.constant 2 : index
    %c0_11 = arith.constant 0 : index
    %c0_12 = arith.constant 0 : index
    %13 = vector.load %arg5[%c2, %c0_11, %c0_12] : memref<4x128x128xbf16, #tpu.memory_space<vmem>>, vector<1x128x128xbf16>
    %14 = vector.shape_cast %13 : vector<1x128x128xbf16> to vector<128x128xbf16>
    %cst_13 = arith.constant dense<0.000000e+00> : vector<2x128xf32>
    %15 = tpu.matmul %12, %14, %cst_13 {dimension_numbers = #tpu.dot_dimension_numbers<[1], [0], [0], [1], [0, 0, 1, 1], [], []>} : vector<2x128xbf16>, vector<128x128xbf16>, vector<2x128xf32> -> vector<2x128xf32>
    %16 = arith.addf %10, %15 : vector<2x128xf32>
    %c0_14 = arith.constant 0 : index
    %c0_15 = arith.constant 0 : index
    %17 = vector.load %arg4[%c0_14, %c0_15] : memref<2x128xf32, #tpu.memory_space<vmem>>, vector<2x128xf32>
    %18 = arith.truncf %17 : vector<2x128xf32> to vector<2x128xbf16>
    %c3 = arith.constant 3 : index
    %c0_16 = arith.constant 0 : index
    %c0_17 = arith.constant 0 : index
    %19 = vector.load %arg5[%c3, %c0_16, %c0_17] : memref<4x128x128xbf16, #tpu.memory_space<vmem>>, vector<1x128x128xbf16>
    %20 = vector.shape_cast %19 : vector<1x128x128xbf16> to vector<128x128xbf16>
    %cst_18 = arith.constant dense<0.000000e+00> : vector<2x128xf32>
    %21 = tpu.matmul %18, %20, %cst_18 {dimension_numbers = #tpu.dot_dimension_numbers<[1], [0], [0], [1], [0, 0, 1, 1], [], []>} : vector<2x128xbf16>, vector<128x128xbf16>, vector<2x128xf32> -> vector<2x128xf32>
    %22 = arith.addf %16, %21 : vector<2x128xf32>
    %c0_19 = arith.constant 0 : index
    %c0_20 = arith.constant 0 : index
    %23 = vector.load %arg6[%c0_19, %c0_20] : memref<1x128xf32, #tpu.memory_space<vmem>>, vector<1x128xf32>
    %24 = vector.broadcast %23 : vector<1x128xf32> to vector<2x128xf32>
    %25 = arith.addf %22, %24 : vector<2x128xf32>
    %c0_21 = arith.constant 0 : index
    %c0_22 = arith.constant 0 : index
    %26 = vector.load %arg7[%c0_21, %c0_22] : memref<2x128xf32, #tpu.memory_space<vmem>>, vector<2x128xf32>
    tpu.vector_store %arg7[%c0_21, %c0_22], %25 {strides = array<i32>} : memref<2x128xf32, #tpu.memory_space<vmem>>, vector<2x128xf32>,
    return
  }
  func.func @transform_0(%arg0: i32) -> (i32, i32) {
    %c0_i32 = arith.constant 0 : i32
    %c0_i32_0 = arith.constant 0 : i32
    return %arg0, %c0_i32 : i32, i32
  }
  func.func @transform_1(%arg0: i32) -> (i32, i32) {
    %c0_i32 = arith.constant 0 : i32
    %c0_i32_0 = arith.constant 0 : i32
    return %arg0, %c0_i32 : i32, i32
  }
  func.func @transform_2(%arg0: i32) -> (i32, i32) {
    %c0_i32 = arith.constant 0 : i32
    %c0_i32_0 = arith.constant 0 : i32
    return %arg0, %c0_i32 : i32, i32
  }
  func.func @transform_3(%arg0: i32) -> (i32, i32) {
    %c0_i32 = arith.constant 0 : i32
    %c0_i32_0 = arith.constant 0 : i32
    return %arg0, %c0_i32 : i32, i32
  }
  func.func @transform_4(%arg0: i32) -> (i32, i32, i32) {
    %c0_i32 = arith.constant 0 : i32
    %c0_i32_0 = arith.constant 0 : i32
    %c0_i32_1 = arith.constant 0 : i32
    %c0_i32_2 = arith.constant 0 : i32
    return %c0_i32, %c0_i32_0, %c0_i32_1 : i32, i32, i32
  }
  func.func @transform_5(%arg0: i32) -> (i32, i32) {
    %c0_i32 = arith.constant 0 : i32
    %c0_i32_0 = arith.constant 0 : i32
    %c0_i32_1 = arith.constant 0 : i32
    return %c0_i32, %c0_i32_0 : i32, i32
  }
  func.func @transform_6(%arg0: i32) -> (i32, i32) {
    %c0_i32 = arith.constant 0 : i32
    %c0_i32_0 = arith.constant 0 : i32
    return %arg0, %c0_i32 : i32, i32
  }
}

</mosaic_0001>

<llo_original>
// kernel: concat_regression_forward.1
$region0: #{concat_regression_forward.1}
  #allocation0 [shape = 'u32[]', space=smem, size = 0x4, offset = 0x4, fixed_abs, tag = 'smem constant byte address 0x4 - core index']
  #allocation1 [shape = 'u32[72,128]{1,0:T(1,128)}', space=vmem, size = 0x9000, scoped, tag = 'internal scratch']
  %s0 = inlined_call_operand.vmem [shape: f32[2,1024], index: 0, kind: input, shape index: {}]
  %s1 = inlined_call_operand.vmem [shape: f32[2,1024], index: 1, kind: input, shape index: {}]
  %s2 = inlined_call_operand.vmem [shape: f32[2,1024], index: 2, kind: input, shape index: {}]
  %s3 = inlined_call_operand.vmem [shape: f32[2,1024], index: 3, kind: input, shape index: {}]
  %s4 = inlined_call_operand.hbm [shape: bf16[4,128,128], index: 4, kind: input, shape index: {}]
  %s5 = inlined_call_operand.vmem [shape: f32[1,128], index: 5, kind: input, shape index: {}]
  %s6 = inlined_call_operand.hbm [shape: f32[2,128], index: 6, kind: output, shape index: {}]
  %s7 = sld [smem:[#allocation0]]
  $region38: #{concat_regression_forward.1} parent=0
    _
  %s9 = ssub.s32 1, %s7
  %s10 = scalar_select 0, %s9, %s7
  $region1: #{concat_regression_forward.1} parent=0
    #allocation2 [shape = 'u8[131072]{0}', space=vmem, size = 0x20000, scoped, tag = 'input window, operand 4, single buffered']
    #allocation3 [shape = 's32[1]{0}', space=sflag, size = 0x4, scoped, tag = 'scoped memory for concat_regression_forward.1']
    #allocation4 [shape = 's32[1]{0}', space=sflag, size = 0x4, scoped, tag = 'scoped memory for concat_regression_forward.1']
    #allocation5 [shape = 'u8[1024]{0}', space=vmem, size = 0x400, scoped, tag = 'output window, operand 0, single buffered']
    %11 = vsyncpa [#allocation3], 0
    %12 = vsyncpa [#allocation4], 0
    // Predicated region
    $region2: #{concat_regression_forward.1} parent=1 // pred_check
      _
    $region3: #{concat_regression_forward.1} parent=1 // pred_check_branch
      %14 = sbr.rel (0) target = $region5
    $region4: #{concat_regression_forward.1} parent=1 // pred_region
      _
    $region5: #{concat_regression_forward.1} parent=1 // pred_fallthru
      _
    // Predicated region
    $region6: #{concat_regression_forward.1} parent=1 // pred_check
      _
    $region7: #{concat_regression_forward.1} parent=1 // pred_check_branch
      %16 = sbr.rel (0) target = $region9
    $region8: #{concat_regression_forward.1} parent=1 // pred_region
      _
    $region9: #{concat_regression_forward.1} parent=1 // pred_fallthru
      _
    // Predicated region
    $region10: #{concat_regression_forward.1} parent=1 // pred_check
      _
    $region11: #{concat_regression_forward.1} parent=1 // pred_check_branch
      %18 = sbr.rel (0) target = $region13
    $region12: #{concat_regression_forward.1} parent=1 // pred_region
      _
    $region13: #{concat_regression_forward.1} parent=1 // pred_fallthru
      _
    // Predicated region
    $region14: #{concat_regression_forward.1} parent=1 // pred_check
      _
    $region15: #{concat_regression_forward.1} parent=1 // pred_check_branch
      %20 = sbr.rel (0) target = $region17
    $region16: #{concat_regression_forward.1} parent=1 // pred_region
      _
    $region17: #{concat_regression_forward.1} parent=1 // pred_fallthru
      _
    // Predicated region
    $region18: #{concat_regression_forward.1} parent=1 // pred_check
      _
    $region19: #{concat_regression_forward.1} parent=1 // pred_check_branch
      %22 = sbr.rel (0) target = $region21
    $region20: #{concat_regression_forward.1} parent=1 // pred_region
      %24 = vsyncadd [#allocation3], 0
      %s25 = sshll.u32 %s4, 4
      %s26 = int_to_ptr.hbm [resolvable:$true] %s25
      %s27 = sshll.u32 [#allocation2], 4
      %s28 = int_to_ptr.vmem [resolvable:$true] %s27
      %33 = dma.hbm_to_vmem [thread:$0]  %s26, 4096, %s28, [#allocation3], 64, 64, 4
    $region21: #{concat_regression_forward.1} parent=1 // pred_fallthru
      _
    // Predicated region
    $region22: #{concat_regression_forward.1} parent=1 // pred_check
      _
    $region23: #{concat_regression_forward.1} parent=1 // pred_check_branch
      %35 = sbr.rel (0) target = $region25
    $region24: #{concat_regression_forward.1} parent=1 // pred_region
      _
    $region25: #{concat_regression_forward.1} parent=1 // pred_fallthru
      _
    // Predicated region
    $region26: #{concat_regression_forward.1} parent=1 // pred_check
      _
    $region27: #{concat_regression_forward.1} parent=1 // pred_check_branch
      %37 = sbr.rel (0) target = $region29
    $region28: #{concat_regression_forward.1} parent=1 // pred_region
      %39 = dma.done [#allocation3], 4096
    $region29: #{concat_regression_forward.1} parent=1 // pred_fallthru
      _
    %v40 = vld [vmem:[%s0] sm:$0x3]
    %v41 = vpack.c.bf16 %v40, %v40
    %v42 = vld [vmem:[#allocation2] sm:$0xf]
    %v43 = vld [vmem:[#allocation2 + $0x4] sm:$0xf]
    %v44 = vld [vmem:[#allocation2 + $0x8] sm:$0xf]
    %v45 = vld [vmem:[#allocation2 + $0xc] sm:$0xf]
    %v46 = vld [vmem:[#allocation2 + $0x10] sm:$0xf]
    %v47 = vld [vmem:[#allocation2 + $0x14] sm:$0xf]
    %v48 = vld [vmem:[#allocation2 + $0x18] sm:$0xf]
    %v49 = vld [vmem:[#allocation2 + $0x1c] sm:$0xf]
    %v50 = vld [vmem:[#allocation2 + $0x20] sm:$0xf]
    %v51 = vld [vmem:[#allocation2 + $0x24] sm:$0xf]
    %v52 = vld [vmem:[#allocation2 + $0x28] sm:$0xf]
    %v53 = vld [vmem:[#allocation2 + $0x2c] sm:$0xf]
    %v54 = vld [vmem:[#allocation2 + $0x30] sm:$0xf]
    %v55 = vld [vmem:[#allocation2 + $0x34] sm:$0xf]
    %v56 = vld [vmem:[#allocation2 + $0x38] sm:$0xf]
    %v57 = vld [vmem:[#allocation2 + $0x3c] sm:$0xf]
    %v58 = vld [vmem:[%s1] sm:$0x3]
    %v59 = vpack.c.bf16 %v58, %v58
    %s60 = scalar_lea.vmem [#allocation2], 64
    %v61 = vld [vmem:[%s60] sm:$0xf]
    %v62 = vld [vmem:[%s60 + $0x4] sm:$0xf]
    %v63 = vld [vmem:[%s60 + $0x8] sm:$0xf]
    %v64 = vld [vmem:[%s60 + $0xc] sm:$0xf]
    %v65 = vld [vmem:[%s60 + $0x10] sm:$0xf]
    %v66 = vld [vmem:[%s60 + $0x14] sm:$0xf]
    %v67 = vld [vmem:[%s60 + $0x18] sm:$0xf]
    %v68 = vld [vmem:[%s60 + $0x1c] sm:$0xf]
    %v69 = vld [vmem:[%s60 + $0x20] sm:$0xf]
    %v70 = vld [vmem:[%s60 + $0x24] sm:$0xf]
    %v71 = vld [vmem:[%s60 + $0x28] sm:$0xf]
    %v72 = vld [vmem:[%s60 + $0x2c] sm:$0xf]
    %v73 = vld [vmem:[%s60 + $0x30] sm:$0xf]
    %v74 = vld [vmem:[%s60 + $0x34] sm:$0xf]
    %v75 = vld [vmem:[%s60 + $0x38] sm:$0xf]
    %v76 = vld [vmem:[%s60 + $0x3c] sm:$0xf]
    %v93 = vunpack.c.l.b16 %v61
    %v94 = vunpack.c.l.b16 %v62
    %v95 = vunpack.c.l.b16 %v63
    %v96 = vunpack.c.l.b16 %v64
    %v97 = vunpack.c.l.b16 %v65
    %v98 = vunpack.c.l.b16 %v66
    %v99 = vunpack.c.l.b16 %v67
    %v100 = vunpack.c.l.b16 %v68
    %v101 = vunpack.c.l.b16 %v69
    %v102 = vunpack.c.l.b16 %v70
    %v103 = vunpack.c.l.b16 %v71
    %v104 = vunpack.c.l.b16 %v72
    %v105 = vunpack.c.l.b16 %v73
    %v106 = vunpack.c.l.b16 %v74
    %v107 = vunpack.c.l.b16 %v75
    %v108 = vunpack.c.l.b16 %v76
    %v109 = vpack.c.b16 %v94, %v93
    %v110 = vpack.c.b16 %v96, %v95
    %v111 = vpack.c.b16 %v98, %v97
    %v112 = vpack.c.b16 %v100, %v99
    %v113 = vpack.c.b16 %v102, %v101
    %v114 = vpack.c.b16 %v104, %v103
    %v115 = vpack.c.b16 %v106, %v105
    %v116 = vpack.c.b16 %v108, %v107
    %125 = vmatpush.bf16.msra.mxu0 %v116
    %126 = vmatpush.bf16.msra.mxu0 %v115
    %127 = vmatpush.bf16.msra.mxu0 %v114
    %128 = vmatpush.bf16.msra.mxu0 %v113
    %129 = vmatpush.bf16.msra.mxu0 %v112
    %130 = vmatpush.bf16.msra.mxu0 %v111
    %131 = vmatpush.bf16.msra.mxu0 %v110
    %132 = vmatpush.bf16.msra.mxu0 %v109
    %133 = vmatmul.bf16.gmra.mxu0 %v59
    %v134 = vpop.f32.mrf.mxu0
    %v135 = vadd.f32 0.0, %v134
    %v136 = vpop.f32.mrf.mxu0
    %137 = vdwg.mxu0
    %v154 = vunpack.c.l.b16 %v42
    %v155 = vunpack.c.l.b16 %v43
    %v156 = vunpack.c.l.b16 %v44
    %v157 = vunpack.c.l.b16 %v45
    %v158 = vunpack.c.l.b16 %v46
    %v159 = vunpack.c.l.b16 %v47
    %v160 = vunpack.c.l.b16 %v48
    %v161 = vunpack.c.l.b16 %v49
    %v162 = vunpack.c.l.b16 %v50
    %v163 = vunpack.c.l.b16 %v51
    %v164 = vunpack.c.l.b16 %v52
    %v165 = vunpack.c.l.b16 %v53
    %v166 = vunpack.c.l.b16 %v54
    %v167 = vunpack.c.l.b16 %v55
    %v168 = vunpack.c.l.b16 %v56
    %v169 = vunpack.c.l.b16 %v57
    %v170 = vpack.c.b16 %v155, %v154
    %v171 = vpack.c.b16 %v157, %v156
    %v172 = vpack.c.b16 %v159, %v158
    %v173 = vpack.c.b16 %v161, %v160
    %v174 = vpack.c.b16 %v163, %v162
    %v175 = vpack.c.b16 %v165, %v164
    %v176 = vpack.c.b16 %v167, %v166
    %v177 = vpack.c.b16 %v169, %v168
    %186 = vmatpush.bf16.msra.mxu0 %v177
    %187 = vmatpush.bf16.msra.mxu0 %v176
    %188 = vmatpush.bf16.msra.mxu0 %v175
    %189 = vmatpush.bf16.msra.mxu0 %v174
    %190 = vmatpush.bf16.msra.mxu0 %v173
    %191 = vmatpush.bf16.msra.mxu0 %v172
    %192 = vmatpush.bf16.msra.mxu0 %v171
    %193 = vmatpush.bf16.msra.mxu0 %v170
    %194 = vmatmul.bf16.gmra.mxu0 %v41
    %v195 = vpop.f32.mrf.mxu0
    %v196 = vadd.f32 %v135, %v195
    %v197 = vpop.f32.mrf.mxu0
    %198 = vdwg.mxu0
    %v199 = vld [vmem:[%s2] sm:$0x3]
    %v200 = vpack.c.bf16 %v199, %v199
    %s201 = scalar_lea.vmem [#allocation2], 128
    %v202 = vld [vmem:[%s201] sm:$0xf]
    %v203 = vld [vmem:[%s201 + $0x4] sm:$0xf]
    %v204 = vld [vmem:[%s201 + $0x8] sm:$0xf]
    %v205 = vld [vmem:[%s201 + $0xc] sm:$0xf]
    %v206 = vld [vmem:[%s201 + $0x10] sm:$0xf]
    %v207 = vld [vmem:[%s201 + $0x14] sm:$0xf]
    %v208 = vld [vmem:[%s201 + $0x18] sm:$0xf]
    %v209 = vld [vmem:[%s201 + $0x1c] sm:$0xf]
    %v210 = vld [vmem:[%s201 + $0x20] sm:$0xf]
    %v211 = vld [vmem:[%s201 + $0x24] sm:$0xf]
    %v212 = vld [vmem:[%s201 + $0x28] sm:$0xf]
    %v213 = vld [vmem:[%s201 + $0x2c] sm:$0xf]
    %v214 = vld [vmem:[%s201 + $0x30] sm:$0xf]
    %v215 = vld [vmem:[%s201 + $0x34] sm:$0xf]
    %v216 = vld [vmem:[%s201 + $0x38] sm:$0xf]
    %v217 = vld [vmem:[%s201 + $0x3c] sm:$0xf]
    %v234 = vunpack.c.l.b16 %v202
    %v235 = vunpack.c.l.b16 %v203
    %v236 = vunpack.c.l.b16 %v204
    %v237 = vunpack.c.l.b16 %v205
    %v238 = vunpack.c.l.b16 %v206
    %v239 = vunpack.c.l.b16 %v207
    %v240 = vunpack.c.l.b16 %v208
    %v241 = vunpack.c.l.b16 %v209
    %v242 = vunpack.c.l.b16 %v210
    %v243 = vunpack.c.l.b16 %v211
    %v244 = vunpack.c.l.b16 %v212
    %v245 = vunpack.c.l.b16 %v213
    %v246 = vunpack.c.l.b16 %v214
    %v247 = vunpack.c.l.b16 %v215
    %v248 = vunpack.c.l.b16 %v216
    %v249 = vunpack.c.l.b16 %v217
    %v250 = vpack.c.b16 %v235, %v234
    %v251 = vpack.c.b16 %v237, %v236
    %v252 = vpack.c.b16 %v239, %v238
    %v253 = vpack.c.b16 %v241, %v240
    %v254 = vpack.c.b16 %v243, %v242
    %v255 = vpack.c.b16 %v245, %v244
    %v256 = vpack.c.b16 %v247, %v246
    %v257 = vpack.c.b16 %v249, %v248
    %266 = vmatpush.bf16.msra.mxu0 %v257
    %267 = vmatpush.bf16.msra.mxu0 %v256
    %268 = vmatpush.bf16.msra.mxu0 %v255
    %269 = vmatpush.bf16.msra.mxu0 %v254
    %270 = vmatpush.bf16.msra.mxu0 %v253
    %271 = vmatpush.bf16.msra.mxu0 %v252
    %272 = vmatpush.bf16.msra.mxu0 %v251
    %273 = vmatpush.bf16.msra.mxu0 %v250
    %274 = vmatmul.bf16.gmra.mxu0 %v200
    %v275 = vpop.f32.mrf.mxu0
    %v276 = vadd.f32 0.0, %v275
    %v277 = vpop.f32.mrf.mxu0
    %278 = vdwg.mxu0
    %v279 = vadd.f32 %v196, %v276
    %v280 = vld [vmem:[%s3] sm:$0x3]
    %v281 = vpack.c.bf16 %v280, %v280
    %s282 = scalar_lea.vmem [#allocation2], 192
    %v283 = vld [vmem:[%s282] sm:$0xf]
    %v284 = vld [vmem:[%s282 + $0x4] sm:$0xf]
    %v285 = vld [vmem:[%s282 + $0x8] sm:$0xf]
    %v286 = vld [vmem:[%s282 + $0xc] sm:$0xf]
    %v287 = vld [vmem:[%s282 + $0x10] sm:$0xf]
    %v288 = vld [vmem:[%s282 + $0x14] sm:$0xf]
    %v289 = vld [vmem:[%s282 + $0x18] sm:$0xf]
    %v290 = vld [vmem:[%s282 + $0x1c] sm:$0xf]
    %v291 = vld [vmem:[%s282 + $0x20] sm:$0xf]
    %v292 = vld [vmem:[%s282 + $0x24] sm:$0xf]
    %v293 = vld [vmem:[%s282 + $0x28] sm:$0xf]
    %v294 = vld [vmem:[%s282 + $0x2c] sm:$0xf]
    %v295 = vld [vmem:[%s282 + $0x30] sm:$0xf]
    %v296 = vld [vmem:[%s282 + $0x34] sm:$0xf]
    %v297 = vld [vmem:[%s282 + $0x38] sm:$0xf]
    %v298 = vld [vmem:[%s282 + $0x3c] sm:$0xf]
    %v315 = vunpack.c.l.b16 %v283
    %v316 = vunpack.c.l.b16 %v284
    %v317 = vunpack.c.l.b16 %v285
    %v318 = vunpack.c.l.b16 %v286
    %v319 = vunpack.c.l.b16 %v287
    %v320 = vunpack.c.l.b16 %v288
    %v321 = vunpack.c.l.b16 %v289
    %v322 = vunpack.c.l.b16 %v290
    %v323 = vunpack.c.l.b16 %v291
    %v324 = vunpack.c.l.b16 %v292
    %v325 = vunpack.c.l.b16 %v293
    %v326 = vunpack.c.l.b16 %v294
    %v327 = vunpack.c.l.b16 %v295
    %v328 = vunpack.c.l.b16 %v296
    %v329 = vunpack.c.l.b16 %v297
    %v330 = vunpack.c.l.b16 %v298
    %v331 = vpack.c.b16 %v316, %v315
    %v332 = vpack.c.b16 %v318, %v317
    %v333 = vpack.c.b16 %v320, %v319
    %v334 = vpack.c.b16 %v322, %v321
    %v335 = vpack.c.b16 %v324, %v323
    %v336 = vpack.c.b16 %v326, %v325
    %v337 = vpack.c.b16 %v328, %v327
    %v338 = vpack.c.b16 %v330, %v329
    %347 = vmatpush.bf16.msra.mxu0 %v338
    %348 = vmatpush.bf16.msra.mxu0 %v337
    %349 = vmatpush.bf16.msra.mxu0 %v336
    %350 = vmatpush.bf16.msra.mxu0 %v335
    %351 = vmatpush.bf16.msra.mxu0 %v334
    %352 = vmatpush.bf16.msra.mxu0 %v333
    %353 = vmatpush.bf16.msra.mxu0 %v332
    %354 = vmatpush.bf16.msra.mxu0 %v331
    %355 = vmatmul.bf16.gmra.mxu0 %v281
    %v356 = vpop.f32.mrf.mxu0
    %v357 = vadd.f32 0.0, %v356
    %v358 = vpop.f32.mrf.mxu0
    %359 = vdwg.mxu0
    %v360 = vadd.f32 %v279, %v357
    %v361 = vld [vmem:[%s5] sm:$0x1]
    %v363 = vperm.slane %v361, 0
    %v365 = vadd.f32 %v360, %v363
    %366 = vst [vmem:[#allocation5] sm:$0x3] %v365
    // Predicated region
    $region30: #{concat_regression_forward.1} parent=1 // pred_check
      _
    $region31: #{concat_regression_forward.1} parent=1 // pred_check_branch
      %368 = sbr.rel (0) target = $region33
    $region32: #{concat_regression_forward.1} parent=1 // pred_region
      %370 = vsyncadd [#allocation4], 0
      %s372 = sshll.u32 [#allocation5], 4
      %s373 = int_to_ptr.vmem [resolvable:$true] %s372
      %s374 = sshll.u32 %s6, 4
      %s375 = int_to_ptr.hbm [resolvable:$true] %s374
      %377 = dma.vmem_to_hbm [thread:$0]  %s373, 32, %s375, [#allocation4]
    $region33: #{concat_regression_forward.1} parent=1 // pred_fallthru
      _
    // Predicated region
    $region34: #{concat_regression_forward.1} parent=1 // pred_check
      _
    $region35: #{concat_regression_forward.1} parent=1 // pred_check_branch
      %379 = sbr.rel (0) target = $region37
    $region36: #{concat_regression_forward.1} parent=1 // pred_region
      %381 = dma.done [#allocation4], 32
    $region37: #{concat_regression_forward.1} parent=1 // pred_fallthru
      _
    %382 = vsyncpa [#allocation3], 1
    %383 = vsyncpa [#allocation4], 1

</llo_original>
